<compile_context>
chip_gen: v7x
topology: tpu7x:2x2x1
jax: 0.10.0
libtpu: 0.0.40
codegen_flags: <defaults>
</compile_context>

<pallas_src>
import jax
import jax.numpy as jnp
from jax.experimental import pallas as pl
from jax.experimental.pallas import tpu as pltpu


def _glu_kernel(x_ref, w_ref, b_ref, o_ref):
    # fused = x @ [Wl | Wr] + [bl | br]  -- one MXU matmul, f32 accumulate.
    fused = jnp.dot(x_ref[...], w_ref[...], preferred_element_type=jnp.float32)
    fused = fused + b_ref[...]
    half = fused.shape[-1] // 2
    left = fused[:, :half]
    right = fused[:, half:]          # sigmoid lowers to the EUP slot (free here)
    o_ref[...] = (left * jax.nn.sigmoid(right)).astype(o_ref.dtype)


def _block_diag(w, g):
    """Block-diagonal of g copies of w: (in_c, out_c) -> (g*in_c, g*out_c)."""
    if g == 1:
        return w
    in_c, out_c = w.shape
    eye = jnp.eye(g, dtype=w.dtype)
    return (eye[:, None, :, None] * w[None, :, None, :]).reshape(g * in_c, g * out_c)


def glu_pallas(x, wl, bl, wr, br, *, tile_m=1024):
    """GLU forward.

    x  : [..., input_channel]
    wl : [input_channel, output_channel]   (= torch weight.T)
    bl : [output_channel]
    wr : [input_channel, output_channel]
    br : [output_channel]
    returns [..., output_channel]
    """
    in_c = x.shape[-1]
    out_c = wl.shape[-1]
    lead_shape = x.shape[:-1]
    m = 1
    for d in lead_shape:
        m *= d

    itemsize = jnp.dtype(x.dtype).itemsize
    w_itemsize = jnp.dtype(wl.dtype).itemsize

    # ------------------------------------------------------------------
    # Lane packing: pack g rows per "super row" so the output last dim is
    # >= 128 lanes (dense vst instead of masked partial stores). Pure
    # wrapper-side row-major reshapes; weights become block-diagonal.
    # ------------------------------------------------------------------
    g = 1
    if out_c < 128 and (128 % out_c == 0):
        g = 128 // out_c
        while g > 1 and ((m % g) != 0 or
                         (g * in_c) * (2 * g * out_c) * w_itemsize > (8 << 20)):
            g //= 2

    mp = m // g
    x2 = x.reshape(mp, g * in_c)

    # Fused weight [blockdiag(Wl) | blockdiag(Wr)] and fused bias.
    w_fused = jnp.concatenate([_block_diag(wl, g), _block_diag(wr, g)], axis=1)
    b_fused = jnp.concatenate([jnp.tile(bl, g), jnp.tile(br, g)]).reshape(1, 2 * g * out_c)

    # ------------------------------------------------------------------
    # Row tiling: as big as VMEM allows (mem-bound kernel), no padding copy.
    # ------------------------------------------------------------------
    tile_m = max(8, (tile_m // 8) * 8)
    bm = min(tile_m, mp)
    if bm < mp:
        bm = max(8, (bm // 8) * 8)      # partial tiles must be sublane-aligned

    def _vmem_est(b):
        x_t = b * g * in_c * itemsize
        o_t = b * g * out_c * itemsize
        w_t = (g * in_c) * (2 * g * out_c) * w_itemsize + 2 * g * out_c * itemsize
        return 2 * (x_t + o_t + w_t)    # assume everything double-buffered

    VMEM_BUDGET = 24 << 20              # headroom vs v7x's 64 MiB physical VMEM
    while bm > 8 and _vmem_est(bm) > VMEM_BUDGET:
        bm = max(8, ((bm // 2) // 8) * 8)
    # NOTE: for very large channel counts the resident fused weight itself can get
    # big; a K/N-blocking grid axis (or single-buffered weight) would be the next step.

    grid = (pl.cdiv(mp, bm),)

    out = pl.pallas_call(
        _glu_kernel,
        out_shape=jax.ShapeDtypeStruct((mp, g * out_c), x.dtype),
        grid_spec=pltpu.PrefetchScalarGridSpec(
            num_scalar_prefetch=0,
            grid=grid,
            in_specs=[
                pl.BlockSpec((bm, g * in_c), lambda i: (i, 0)),            # x tile
                pl.BlockSpec((g * in_c, 2 * g * out_c), lambda i: (0, 0)),  # fused W (resident)
                pl.BlockSpec((1, 2 * g * out_c), lambda i: (0, 0)),         # fused bias
            ],
            out_specs=pl.BlockSpec((bm, g * out_c), lambda i: (i, 0)),
        ),
        compiler_params=pltpu.CompilerParams(
            dimension_semantics=("parallel",),      # M axis shards across v7x's 2 TCs
            vmem_limit_bytes=48 << 20,              # above 32 MiB scoped default, < 64 MiB
        ),
    )(x2, w_fused, b_fused)

    # (mp, g*out_c) is the row-major view of (m, out_c): free reshape back.
    return out.reshape(*lead_shape, out_c)


def _init_linear_params(key, in_features, out_features, dtype=jnp.float32):
    # Match nn.Linear default init: U(-1/sqrt(in), 1/sqrt(in)) for weight & bias.
    kw, kb = jax.random.split(key)
    bound = 1.0 / (in_features ** 0.5)
    # Stored already transposed: (in, out) so kernel does x @ W.
    w = jax.random.uniform(kw, (in_features, out_features), dtype,
                           minval=-bound, maxval=bound)
    b = jax.random.uniform(kb, (out_features,), dtype, minval=-bound, maxval=bound)
    return w, b


if __name__ == "__main__":
    key = jax.random.PRNGKey(0)
    k_x, k_l, k_r = jax.random.split(key, 3)

    input_channel = 32
    output_channel = 32
    # x: [batch=2, nodes=4, seq=8, input_channel=32]  (Linear acts on last axis)
    x = jax.random.normal(k_x, (2, 4, 8, input_channel), dtype=jnp.float32)

    wl, bl = _init_linear_params(k_l, input_channel, output_channel)
    wr, br = _init_linear_params(k_r, input_channel, output_channel)

    out = glu_pallas(x, wl, bl, wr, br)
    out = jax.block_until_ready(out)

    # Pure-JAX reference for a sanity check.
    ref = (x @ wl + bl) * jax.nn.sigmoid(x @ wr + br)
    assert out.shape == ref.shape
    assert jnp.allclose(out, ref, atol=1e-5, rtol=1e-5)

    print("KERNEL_OK")
</pallas_src>

<mosaic_0001>
module attributes {stable_mosaic.version = 11 : i64} {
  func.func @_glu_kernel(%arg0: i32, %arg1: memref<16x128xf32, #tpu.memory_space<vmem>>, %arg2: memref<128x256xf32, #tpu.memory_space<vmem>>, %arg3: memref<1x256xf32, #tpu.memory_space<vmem>>, %arg4: memref<16x128xf32, #tpu.memory_space<vmem>>) attributes {dimension_semantics = [#tpu.dimension_semantics<parallel>], iteration_bounds = array<i64: 1>, scalar_prefetch = 0 : i64, scratch_operands = 0 : i64, tpu.core_type = #tpu.core_type<tc>, window_params = [{transform_indices = @transform_0, window_bounds = array<i64: 16, 128>}, {pipeline_mode = #tpu.pipeline_mode<synchronous>, transform_indices = @transform_1, window_bounds = array<i64: 128, 256>}, {pipeline_mode = #tpu.pipeline_mode<synchronous>, transform_indices = @transform_2, window_bounds = array<i64: 1, 256>}, {transform_indices = @transform_3, window_bounds = array<i64: 16, 128>}]} {
    %c0 = arith.constant 0 : index
    %c0_0 = arith.constant 0 : index
    %0 = vector.load %arg1[%c0, %c0_0] : memref<16x128xf32, #tpu.memory_space<vmem>>, vector<16x128xf32>
    %c0_1 = arith.constant 0 : index
    %c0_2 = arith.constant 0 : index
    %1 = vector.load %arg2[%c0_1, %c0_2] : memref<128x256xf32, #tpu.memory_space<vmem>>, vector<128x256xf32>
    %cst = arith.constant dense<0.000000e+00> : vector<16x256xf32>
    %2 = tpu.matmul %0, %1, %cst {dimension_numbers = #tpu.dot_dimension_numbers<[1], [0], [0], [1], [0, 0, 1, 1], [], []>} : vector<16x128xf32>, vector<128x256xf32>, vector<16x256xf32> -> vector<16x256xf32>
    %c0_3 = arith.constant 0 : index
    %c0_4 = arith.constant 0 : index
    %3 = vector.load %arg3[%c0_3, %c0_4] : memref<1x256xf32, #tpu.memory_space<vmem>>, vector<1x256xf32>
    %4 = vector.broadcast %3 : vector<1x256xf32> to vector<16x256xf32>
    %5 = arith.addf %2, %4 : vector<16x256xf32>
    %6 = vector.extract_strided_slice %5 {offsets = [0, 0], sizes = [16, 128], strides = [1, 1]} : vector<16x256xf32> to vector<16x128xf32>
    %7 = vector.extract_strided_slice %5 {offsets = [0, 128], sizes = [16, 128], strides = [1, 1]} : vector<16x256xf32> to vector<16x128xf32>
    %8 = arith.negf %7 : vector<16x128xf32>
    %9 = math.exp %8 : vector<16x128xf32>
    %cst_5 = arith.constant 1.000000e+00 : f32
    %10 = vector.broadcast %cst_5 : f32 to vector<16x128xf32>
    %11 = arith.addf %10, %9 : vector<16x128xf32>
    %12 = arith.divf %10, %11 : vector<16x128xf32>
    %13 = arith.mulf %6, %12 : vector<16x128xf32>
    %c0_6 = arith.constant 0 : index
    %c0_7 = arith.constant 0 : index
    %14 = vector.load %arg4[%c0_6, %c0_7] : memref<16x128xf32, #tpu.memory_space<vmem>>, vector<16x128xf32>
    tpu.vector_store %arg4[%c0_6, %c0_7], %13 {strides = array<i32>} : memref<16x128xf32, #tpu.memory_space<vmem>>, vector<16x128xf32>,
    return
  }
  func.func @transform_0(%arg0: i32) -> (i32, i32) {
    %c0_i32 = arith.constant 0 : i32
    %c0_i32_0 = arith.constant 0 : i32
    return %arg0, %c0_i32 : i32, i32
  }
  func.func @transform_1(%arg0: i32) -> (i32, i32) {
    %c0_i32 = arith.constant 0 : i32
    %c0_i32_0 = arith.constant 0 : i32
    %c0_i32_1 = arith.constant 0 : i32
    return %c0_i32, %c0_i32_0 : i32, i32
  }
  func.func @transform_2(%arg0: i32) -> (i32, i32) {
    %c0_i32 = arith.constant 0 : i32
    %c0_i32_0 = arith.constant 0 : i32
    %c0_i32_1 = arith.constant 0 : i32
    return %c0_i32, %c0_i32_0 : i32, i32
  }
  func.func @transform_3(%arg0: i32) -> (i32, i32) {
    %c0_i32 = arith.constant 0 : i32
    %c0_i32_0 = arith.constant 0 : i32
    return %arg0, %c0_i32 : i32, i32
  }
}

</mosaic_0001>

<llo_original>
// kernel: tpu_custom_call.1
$region0: #{tpu_custom_call.1}
  #allocation0 [shape = 'u32[]', space=smem, size = 0x4, offset = 0x4, fixed_abs, tag = 'smem constant byte address 0x4 - core index']
  #allocation1 [shape = 'u32[144,128]{1,0:T(1,128)}', space=vmem, size = 0x12000, scoped, tag = 'internal scratch']
  %s0 = inlined_call_operand.hbm [shape: f32[16,128], index: 0, kind: input, shape index: {}]
  %s1 = inlined_call_operand.hbm [shape: f32[128,256], index: 1, kind: input, shape index: {}]
  %s2 = inlined_call_operand.vmem [shape: f32[1,256], index: 2, kind: input, shape index: {}]
  %s3 = inlined_call_operand.hbm [shape: f32[16,128], index: 3, kind: output, shape index: {}]
  %s4 = sld [smem:[#allocation0]]
  $region30: #{tpu_custom_call.1} parent=0
    _
  %s6 = ssub.s32 1, %s4
  %s7 = scalar_select 0, %s6, %s4
  $region1: #{tpu_custom_call.1} parent=0
    #allocation2 [shape = 'u8[8192]{0}', space=vmem, size = 0x2000, scoped, tag = 'input window, operand 0, single buffered']
    #allocation3 [shape = 's32[1]{0}', space=sflag, size = 0x4, scoped, tag = 'scoped memory for tpu_custom_call.1']
    #allocation4 [shape = 's32[1]{0}', space=sflag, size = 0x4, scoped, tag = 'scoped memory for tpu_custom_call.1']
    #allocation5 [shape = 'u8[131072]{0}', space=vmem, size = 0x20000, scoped, tag = 'input window, operand 1, single buffered']
    #allocation6 [shape = 's32[1]{0}', space=sflag, size = 0x4, scoped, tag = 'scoped memory for tpu_custom_call.1']
    #allocation7 [shape = 'u8[8192]{0}', space=vmem, size = 0x2000, scoped, tag = 'output window, operand 0, single buffered']
    %8 = vsyncpa [#allocation3], 0
    %9 = vsyncpa [#allocation6], 0
    %10 = vsyncpa [#allocation4], 0
    // Predicated region
    $region2: #{tpu_custom_call.1} parent=1 // pred_check
      _
    $region3: #{tpu_custom_call.1} parent=1 // pred_check_branch
      %12 = sbr.rel (0) target = $region5
    $region4: #{tpu_custom_call.1} parent=1 // pred_region
      %s14 = ssub.s32 256, 256
      %15 = vsyncadd [#allocation3], %s14
      %s16 = sshll.u32 [#allocation2], 4
      %s17 = int_to_ptr.vmem [resolvable:$true] %s16
      %22 = dma.hbm_to_vmem [thread:$0]  %s0, 256, %s17, [#allocation3], 128, 128, 8
    $region5: #{tpu_custom_call.1} parent=1 // pred_fallthru
      _
    // Predicated region
    $region6: #{tpu_custom_call.1} parent=1 // pred_check
      _
    $region7: #{tpu_custom_call.1} parent=1 // pred_check_branch
      %24 = sbr.rel (0) target = $region9
    $region8: #{tpu_custom_call.1} parent=1 // pred_region
      %s26 = ssub.s32 4096, 4096
      %27 = vsyncadd [#allocation6], %s26
      %s28 = sshll.u32 [#allocation5], 4
      %s29 = int_to_ptr.vmem [resolvable:$true] %s28
      %34 = dma.hbm_to_vmem [thread:$0]  %s1, 4096, %s29, [#allocation6], 256, 256, 16
    $region9: #{tpu_custom_call.1} parent=1 // pred_fallthru
      _
    // Predicated region
    $region10: #{tpu_custom_call.1} parent=1 // pred_check
      _
    $region11: #{tpu_custom_call.1} parent=1 // pred_check_branch
      %36 = sbr.rel (0) target = $region13
    $region12: #{tpu_custom_call.1} parent=1 // pred_region
      _
    $region13: #{tpu_custom_call.1} parent=1 // pred_fallthru
      _
    // Predicated region
    $region14: #{tpu_custom_call.1} parent=1 // pred_check
      _
    $region15: #{tpu_custom_call.1} parent=1 // pred_check_branch
      %38 = sbr.rel (0) target = $region17
    $region16: #{tpu_custom_call.1} parent=1 // pred_region
      %39 = dma.done [#allocation3], 256
    $region17: #{tpu_custom_call.1} parent=1 // pred_fallthru
      _
    // Predicated region
    $region18: #{tpu_custom_call.1} parent=1 // pred_check
      _
    $region19: #{tpu_custom_call.1} parent=1 // pred_check_branch
      %41 = sbr.rel (0) target = $region21
    $region20: #{tpu_custom_call.1} parent=1 // pred_region
      %42 = dma.done [#allocation6], 4096
    $region21: #{tpu_custom_call.1} parent=1 // pred_fallthru
      _
    %v43 = vld [vmem:[#allocation2] sm:$0xff]
    %v44 = vld [vmem:[#allocation2 + $0x8] sm:$0xff]
    %v45 = vld [vmem:[#allocation5] sm:$0xff]
    %v46 = vld [vmem:[#allocation5 + $0x8] sm:$0xff]
    %v47 = vld [vmem:[#allocation5 + $0x10] sm:$0xff]
    %v48 = vld [vmem:[#allocation5 + $0x18] sm:$0xff]
    %v49 = vld [vmem:[#allocation5 + $0x20] sm:$0xff]
    %v50 = vld [vmem:[#allocation5 + $0x28] sm:$0xff]
    %v51 = vld [vmem:[#allocation5 + $0x30] sm:$0xff]
    %v52 = vld [vmem:[#allocation5 + $0x38] sm:$0xff]
    %v53 = vld [vmem:[#allocation5 + $0x40] sm:$0xff]
    %v54 = vld [vmem:[#allocation5 + $0x48] sm:$0xff]
    %v55 = vld [vmem:[#allocation5 + $0x50] sm:$0xff]
    %v56 = vld [vmem:[#allocation5 + $0x58] sm:$0xff]
    %v57 = vld [vmem:[#allocation5 + $0x60] sm:$0xff]
    %v58 = vld [vmem:[#allocation5 + $0x68] sm:$0xff]
    %v59 = vld [vmem:[#allocation5 + $0x70] sm:$0xff]
    %v60 = vld [vmem:[#allocation5 + $0x78] sm:$0xff]
    %v61 = vld [vmem:[#allocation5 + $0x80] sm:$0xff]
    %v62 = vld [vmem:[#allocation5 + $0x88] sm:$0xff]
    %v63 = vld [vmem:[#allocation5 + $0x90] sm:$0xff]
    %v64 = vld [vmem:[#allocation5 + $0x98] sm:$0xff]
    %v65 = vld [vmem:[#allocation5 + $0xa0] sm:$0xff]
    %v66 = vld [vmem:[#allocation5 + $0xa8] sm:$0xff]
    %v67 = vld [vmem:[#allocation5 + $0xb0] sm:$0xff]
    %v68 = vld [vmem:[#allocation5 + $0xb8] sm:$0xff]
    %v69 = vld [vmem:[#allocation5 + $0xc0] sm:$0xff]
    %v70 = vld [vmem:[#allocation5 + $0xc8] sm:$0xff]
    %v71 = vld [vmem:[#allocation5 + $0xd0] sm:$0xff]
    %v72 = vld [vmem:[#allocation5 + $0xd8] sm:$0xff]
    %v73 = vld [vmem:[#allocation5 + $0xe0] sm:$0xff]
    %v74 = vld [vmem:[#allocation5 + $0xe8] sm:$0xff]
    %v75 = vld [vmem:[#allocation5 + $0xf0] sm:$0xff]
    %v76 = vld [vmem:[#allocation5 + $0xf8] sm:$0xff]
    %v77 = vld [vmem:[%s2] sm:$0x3]
    %v79 = vlaneseq
    %v80 = vshrl.u32 %v79, 7
    %v81 = vsub.s32 0, %v80
    %v82 = vrot.slane %v77, %v81
    %v83 = vlaneseq
    %v84 = vshrl.u32 %v83, 7
    %v85 = vsub.s32 1, %v84
    %v86 = vrot.slane %v77, %v85
    %89 = vmatprep.subr.mxu0 %v46
    %90 = vmatpush1.msra.mxu0 %v45
    %91 = vmatprep.subr.mxu0 %v48
    %92 = vmatpush1.msra.mxu0 %v47
    %93 = vmatprep.subr.mxu0 %v50
    %94 = vmatpush1.msra.mxu0 %v49
    %95 = vmatprep.subr.mxu0 %v52
    %96 = vmatpush1.msra.mxu0 %v51
    %97 = vmatprep.subr.mxu0 %v54
    %98 = vmatpush1.msra.mxu0 %v53
    %99 = vmatprep.subr.mxu0 %v56
    %100 = vmatpush1.msra.mxu0 %v55
    %101 = vmatprep.subr.mxu0 %v58
    %102 = vmatpush1.msra.mxu0 %v57
    %103 = vmatprep.subr.mxu0 %v60
    %104 = vmatpush1.msra.mxu0 %v59
    %105 = vmatprep.subr.mxu0 %v62
    %106 = vmatpush1.msra.mxu0 %v61
    %107 = vmatprep.subr.mxu0 %v64
    %108 = vmatpush1.msra.mxu0 %v63
    %109 = vmatprep.subr.mxu0 %v66
    %110 = vmatpush1.msra.mxu0 %v65
    %111 = vmatprep.subr.mxu0 %v68
    %112 = vmatpush1.msra.mxu0 %v67
    %113 = vmatprep.subr.mxu0 %v70
    %114 = vmatpush1.msra.mxu0 %v69
    %115 = vmatprep.subr.mxu0 %v72
    %116 = vmatpush1.msra.mxu0 %v71
    %117 = vmatprep.subr.mxu0 %v74
    %118 = vmatpush1.msra.mxu0 %v73
    %119 = vmatprep.subr.mxu0 %v76
    %120 = vmatpush1.msra.mxu0 %v75
    %121 = vmatprep.subr.mxu0 0.0
    %122 = vmatpush1.msra.mxu0 0.0
    %123 = vmatprep.subr.mxu0 0.0
    %124 = vmatpush1.msra.mxu0 0.0
    %125 = vmatprep.subr.mxu0 0.0
    %126 = vmatpush1.msra.mxu0 0.0
    %127 = vmatprep.subr.mxu0 0.0
    %128 = vmatpush1.msra.mxu0 0.0
    %129 = vmatprep.subr.mxu0 0.0
    %130 = vmatpush1.msra.mxu0 0.0
    %131 = vmatprep.subr.mxu0 0.0
    %132 = vmatpush1.msra.mxu0 0.0
    %133 = vmatprep.subr.mxu0 0.0
    %134 = vmatpush1.msra.mxu0 0.0
    %135 = vmatprep.subr.mxu0 0.0
    %136 = vmatpush1.msra.mxu0 0.0
    %137 = vmatprep.subr.mxu0 0.0
    %138 = vmatpush1.msra.mxu0 0.0
    %139 = vmatprep.subr.mxu0 0.0
    %140 = vmatpush1.msra.mxu0 0.0
    %141 = vmatprep.subr.mxu0 0.0
    %142 = vmatpush1.msra.mxu0 0.0
    %143 = vmatprep.subr.mxu0 0.0
    %144 = vmatpush1.msra.mxu0 0.0
    %145 = vmatprep.subr.mxu0 0.0
    %146 = vmatpush1.msra.mxu0 0.0
    %147 = vmatprep.subr.mxu0 0.0
    %148 = vmatpush1.msra.mxu0 0.0
    %149 = vmatprep.subr.mxu0 0.0
    %150 = vmatpush1.msra.mxu0 0.0
    %151 = vmatprep.subr.mxu0 0.0
    %152 = vmatpush1.msra.mxu0 0.0
    %153 = vmatprep.mubr.f32.mxu0 0.0
    %154 = vmatmul.mubr.f32.gmra.mrb[0].mxu0 %v43
    %v155 = vpop.f32.mrb[0].mxu0
    %v156 = vadd.f32 %v82, %v155
    %v157 = vpop.f32.mrb[0].mxu0
    %v158 = vadd.f32 %v86, %v157
    %159 = vmatprep.mubr.f32.mxu0 0.0
    %160 = vmatmul.mubr.f32.gmra.mrb[0].mxu0 %v44
    %v161 = vpop.f32.mrb[0].mxu0
    %v162 = vadd.f32 %v82, %v161
    %v163 = vpop.f32.mrb[0].mxu0
    %v164 = vadd.f32 %v86, %v163
    %165 = vdwg.mxu0
    %v166 = vxor.u32 %v158, 2147483648
    %v167 = vxor.u32 %v164, 2147483648
    %v168 = vmul.f32 %v166, 1.442695
    %v169 = vpow.pop %v168
    %v170 = vmul.f32 %v167, 1.442695
    %v171 = vpow.pop %v170
    %v172 = vadd.f32 %v169, 1.0
    %v173 = vadd.f32 %v171, 1.0
    %v174 = vrcp.pop %v172
    %v175 = vmul.f32 1.0, %v174
    %v176 = vrcp.pop %v173
    %v177 = vmul.f32 1.0, %v176
    %v178 = vmul.f32 %v156, %v175
    %v179 = vmul.f32 %v162, %v177
    %180 = vst [vmem:[#allocation7] sm:$0xff] %v178
    %181 = vst [vmem:[#allocation7 + $0x8] sm:$0xff] %v179
    // Predicated region
    $region22: #{tpu_custom_call.1} parent=1 // pred_check
      _
    $region23: #{tpu_custom_call.1} parent=1 // pred_check_branch
      %183 = sbr.rel (0) target = $region25
    $region24: #{tpu_custom_call.1} parent=1 // pred_region
      %s185 = ssub.s32 256, 256
      %186 = vsyncadd [#allocation4], %s185
      %s187 = sshll.u32 [#allocation7], 4
      %s188 = int_to_ptr.vmem [resolvable:$true] %s187
      %193 = dma.vmem_to_hbm [thread:$0]  %s188, 256, %s3, [#allocation4], 128, 128, 8
    $region25: #{tpu_custom_call.1} parent=1 // pred_fallthru
      _
    // Predicated region
    $region26: #{tpu_custom_call.1} parent=1 // pred_check
      _
    $region27: #{tpu_custom_call.1} parent=1 // pred_check_branch
      %195 = sbr.rel (0) target = $region29
    $region28: #{tpu_custom_call.1} parent=1 // pred_region
      %196 = dma.done [#allocation4], 256
    $region29: #{tpu_custom_call.1} parent=1 // pred_fallthru
      _
    %197 = vsyncpa [#allocation3], 1
    %198 = vsyncpa [#allocation6], 1
    %199 = vsyncpa [#allocation4], 1

</llo_original>
